<compile_context>
chip_gen: v7x
topology: tpu7x:2x2x1
jax: 0.10.0
libtpu: 0.0.40
codegen_flags: <defaults>
</compile_context>

<pallas_src>
import jax
import jax.numpy as jnp
from jax.experimental import pallas as pl
from jax.experimental.pallas import tpu as pltpu


def _copy_kernel(x_ref, o_ref):
    # Pure VMEM copy of the current tile.
    o_ref[...] = x_ref[...]


_TARGET_BLOCK_BYTES = 6 * 1024 * 1024   # per block; 4x block (in+out, dbl-buf) < 32 MiB
_MAX_COLS = 8192                        # lane-dense width cap


def _sublane_pack(dtype) -> int:
    """Sublane packing factor: 8 for 32-bit, 16 for 16-bit, 32 for 8-bit dtypes."""
    itemsize = jnp.dtype(dtype).itemsize
    return max(8, 32 // max(1, itemsize))


def _pick_cols(total: int):
    """Largest divisor of `total` that is a multiple of 128 (capped at _MAX_COLS)."""
    cap = min(_MAX_COLS, (total // 128) * 128)
    for c in range(cap, 127, -128):
        if total % c == 0:
            return c
    return None


def _compiler_params(block_bytes: int) -> pltpu.CompilerParams:
    # Cover in + out, double-buffered, plus headroom; >= 32 MiB is safe on
    # v5e/v6e (128 MiB physical) and within v7x's 64 MiB physical per TC.
    vmem_limit = max(32 << 20, 4 * block_bytes + (4 << 20))
    return pltpu.CompilerParams(
        dimension_semantics=("parallel",),   # v7x: both TCs split the copy
        vmem_limit_bytes=vmem_limit,
    )


def _identity_pallas_copy(x):
    """Pallas HBM->HBM memcpy of x (same shape, dtype, values)."""
    orig_shape = x.shape
    dtype = x.dtype
    total = int(x.size)
    itemsize = jnp.dtype(dtype).itemsize
    cost = pl.CostEstimate(flops=0, transcendentals=0,
                           bytes_accessed=2 * total * itemsize)

    cols = _pick_cols(total)
    if cols is None:
        # Awkward size (total not a multiple of 128): tiled 1D copy; Pallas
        # masks the tail block, VMEM stays bounded, pipelining still overlaps.
        padded = ((total + 127) // 128) * 128
        c = max(128, min((_TARGET_BLOCK_BYTES // itemsize) // 128 * 128, padded))
        x2d = x.reshape(1, total)
        out = pl.pallas_call(
            _copy_kernel,
            out_shape=jax.ShapeDtypeStruct((1, total), dtype),
            grid=(pl.cdiv(total, c),),
            in_specs=[pl.BlockSpec((1, c), lambda i: (0, i))],
            out_specs=pl.BlockSpec((1, c), lambda i: (0, i)),
            input_output_aliases={0: 0},
            cost_estimate=cost,
            compiler_params=_compiler_params(c * itemsize),
        )(x2d)
        return out.reshape(orig_shape)

    rows = total // cols
    x2d = x.reshape(rows, cols)
    pack = _sublane_pack(dtype)

    if rows <= pack:
        tm = rows  # full row extent: always a legal block dim
    else:
        tm_target = _TARGET_BLOCK_BYTES // (cols * itemsize)
        tm_target = max(pack, (tm_target // pack) * pack)
        tm_target = min(tm_target, (rows // pack) * pack)
        tm = None
        # Prefer a tile that divides rows exactly (no masked tail block).
        for cand in range(tm_target, pack - 1, -pack):
            if rows % cand == 0:
                tm = cand
                break
        if tm is None:
            tm = tm_target  # remainder block handled (masked) by Pallas

    out = pl.pallas_call(
        _copy_kernel,
        out_shape=jax.ShapeDtypeStruct((rows, cols), dtype),
        grid=(pl.cdiv(rows, tm),),
        in_specs=[pl.BlockSpec((tm, cols), lambda i: (i, 0))],
        out_specs=pl.BlockSpec((tm, cols), lambda i: (i, 0)),
        input_output_aliases={0: 0},
        cost_estimate=cost,
        compiler_params=_compiler_params(tm * cols * itemsize),
    )(x2d)
    return out.reshape(orig_shape)


def identity(x, *args, use_pallas: bool = False, **kwargs):
    """Identity.forward(x, *args, **kwargs) -> x.

    Default path returns x with zero HBM traffic (a Pallas memcpy can never
    beat not copying).  Pass use_pallas=True to route through the tuned
    Pallas copy kernel.
    """
    if not use_pallas or x.size == 0:
        return x
    return _identity_pallas_copy(x)


if __name__ == "__main__":
    key = jax.random.PRNGKey(0)
    # NCHW feature map consistent with typical SR3 usage: batch=2, channels=4, 16x16.
    x = jax.random.normal(key, (2, 4, 16, 16), dtype=jnp.float32)

    # Default (recommended) path: zero-cost identity.
    y_fast = jax.block_until_ready(identity(x))
    assert y_fast.shape == x.shape and y_fast.dtype == x.dtype
    assert bool(jnp.all(y_fast == x)), "Identity (fast path) differs from input"

    # Opt-in Pallas memcpy path (lane-dense tiled copy).
    y = jax.block_until_ready(identity(x, use_pallas=True))
    assert y.shape == x.shape, (y.shape, x.shape)
    assert y.dtype == x.dtype, (y.dtype, x.dtype)
    assert bool(jnp.all(y == x)), "Identity (pallas) output differs from input"

    # Awkward size not divisible by 128: exercises the tiled 1D fallback.
    x_odd = jax.random.normal(jax.random.PRNGKey(0), (3, 5, 7), dtype=jnp.float32)
    y_odd = jax.block_until_ready(identity(x_odd, use_pallas=True))
    assert y_odd.shape == x_odd.shape and y_odd.dtype == x_odd.dtype
    assert bool(jnp.all(y_odd == x_odd)), "Identity (fallback) differs from input"

    print("KERNEL_OK")
</pallas_src>

<mosaic_0001>
module attributes {stable_mosaic.version = 11 : i64} {
  func.func @_copy_kernel(%arg0: i32, %arg1: memref<1x2048xf32, #tpu.memory_space<vmem>>, %arg2: memref<1x2048xf32, #tpu.memory_space<vmem>>) attributes {dimension_semantics = [#tpu.dimension_semantics<parallel>], iteration_bounds = array<i64: 1>, scalar_prefetch = 0 : i64, scratch_operands = 0 : i64, tpu.core_type = #tpu.core_type<tc>, window_params = [{transform_indices = @transform_0, window_bounds = array<i64: 1, 2048>}, {transform_indices = @transform_1, window_bounds = array<i64: 1, 2048>}]} {
    %c0 = arith.constant 0 : index
    %c0_0 = arith.constant 0 : index
    %0 = vector.load %arg1[%c0, %c0_0] : memref<1x2048xf32, #tpu.memory_space<vmem>>, vector<1x2048xf32>
    %c0_1 = arith.constant 0 : index
    %c0_2 = arith.constant 0 : index
    %1 = vector.load %arg2[%c0_1, %c0_2] : memref<1x2048xf32, #tpu.memory_space<vmem>>, vector<1x2048xf32>
    tpu.vector_store %arg2[%c0_1, %c0_2], %0 {strides = array<i32>} : memref<1x2048xf32, #tpu.memory_space<vmem>>, vector<1x2048xf32>,
    return
  }
  func.func @transform_0(%arg0: i32) -> (i32, i32) {
    %c0_i32 = arith.constant 0 : i32
    %c0_i32_0 = arith.constant 0 : i32
    return %arg0, %c0_i32 : i32, i32
  }
  func.func @transform_1(%arg0: i32) -> (i32, i32) {
    %c0_i32 = arith.constant 0 : i32
    %c0_i32_0 = arith.constant 0 : i32
    return %arg0, %c0_i32 : i32, i32
  }
}

</mosaic_0001>

<llo_original>
// kernel: tpu_custom_call.1
$region0: #{tpu_custom_call.1}
  #allocation0 [shape = 'u32[]', space=smem, size = 0x4, offset = 0x4, fixed_abs, tag = 'smem constant byte address 0x4 - core index']
  #allocation1 [shape = 'u32[144,128]{1,0:T(1,128)}', space=vmem, size = 0x12000, scoped, tag = 'internal scratch']
  %s0 = inlined_call_operand.hbm [shape: f32[1,2048], index: 0, kind: input, shape index: {}, may-alias: {0,1}]
  %s1 = inlined_call_operand.hbm [shape: f32[1,2048], index: 1, kind: output, shape index: {}, may-alias: {0,1}]
  %s2 = sld [smem:[#allocation0]]
  $region18: #{tpu_custom_call.1} parent=0
    _
  %s4 = ssub.s32 1, %s2
  %s5 = scalar_select 0, %s4, %s2
  $region1: #{tpu_custom_call.1} parent=0
    #allocation2 [shape = 'u8[8192]{0}', space=vmem, size = 0x2000, scoped, tag = 'input window, operand 0, single buffered']
    #allocation3 [shape = 's32[1]{0}', space=sflag, size = 0x4, scoped, tag = 'scoped memory for tpu_custom_call.1']
    #allocation4 [shape = 's32[1]{0}', space=sflag, size = 0x4, scoped, tag = 'scoped memory for tpu_custom_call.1']
    #allocation5 [shape = 'u8[8192]{0}', space=vmem, size = 0x2000, scoped, tag = 'output window, operand 0, single buffered']
    %6 = vsyncpa [#allocation3], 0
    %7 = vsyncpa [#allocation4], 0
    // Predicated region
    $region2: #{tpu_custom_call.1} parent=1 // pred_check
      _
    $region3: #{tpu_custom_call.1} parent=1 // pred_check_branch
      %9 = sbr.rel (0) target = $region5
    $region4: #{tpu_custom_call.1} parent=1 // pred_region
      %s11 = ssub.s32 256, 256
      %12 = vsyncadd [#allocation3], %s11
      %s14 = sshll.u32 [#allocation2], 4
      %s15 = int_to_ptr.vmem [resolvable:$true] %s14
      %17 = dma.hbm_to_vmem [thread:$0]  %s0, 256, %s15, [#allocation3]
    $region5: #{tpu_custom_call.1} parent=1 // pred_fallthru
      _
    // Predicated region
    $region6: #{tpu_custom_call.1} parent=1 // pred_check
      _
    $region7: #{tpu_custom_call.1} parent=1 // pred_check_branch
      %19 = sbr.rel (0) target = $region9
    $region8: #{tpu_custom_call.1} parent=1 // pred_region
      %20 = dma.done [#allocation3], 256
    $region9: #{tpu_custom_call.1} parent=1 // pred_fallthru
      _
    %v21 = vld [vmem:[#allocation2] sm:$0xff]
    %v22 = vld [vmem:[#allocation2 + $0x8] sm:$0xff]
    %23 = vst [vmem:[#allocation5] sm:$0xff] %v21
    %24 = vst [vmem:[#allocation5 + $0x8] sm:$0xff] %v22
    // Predicated region
    $region10: #{tpu_custom_call.1} parent=1 // pred_check
      _
    $region11: #{tpu_custom_call.1} parent=1 // pred_check_branch
      %26 = sbr.rel (0) target = $region13
    $region12: #{tpu_custom_call.1} parent=1 // pred_region
      %s28 = ssub.s32 256, 256
      %29 = vsyncadd [#allocation4], %s28
      %s31 = sshll.u32 [#allocation5], 4
      %s32 = int_to_ptr.vmem [resolvable:$true] %s31
      %34 = dma.vmem_to_hbm [thread:$0]  %s32, 256, %s1, [#allocation4]
    $region13: #{tpu_custom_call.1} parent=1 // pred_fallthru
      _
    // Predicated region
    $region14: #{tpu_custom_call.1} parent=1 // pred_check
      _
    $region15: #{tpu_custom_call.1} parent=1 // pred_check_branch
      %36 = sbr.rel (0) target = $region17
    $region16: #{tpu_custom_call.1} parent=1 // pred_region
      %37 = dma.done [#allocation4], 256
    $region17: #{tpu_custom_call.1} parent=1 // pred_fallthru
      _
    %38 = vsyncpa [#allocation3], 1
    %39 = vsyncpa [#allocation4], 1

</llo_original>
